<compile_context>
chip_gen: v6e
topology: v6e:2x2x1
jax: 0.10.0
libtpu: 0.0.40
codegen_flags: <defaults>
</compile_context>

<pallas_src>
import math
import functools

import jax
import jax.numpy as jnp
import numpy as np
from jax import lax
from jax.experimental import pallas as pl
from jax.experimental.pallas import tpu as pltpu


# ----------------------------------------------------------------------------
# Helpers
# ----------------------------------------------------------------------------
def _choose_seq_tile(s: int, target: int = 256) -> int:
    """Largest tile <= target that divides s (multiple of 8 if possible)."""
    if s <= target:
        return s
    for t in range(target, 7, -1):
        if t % 8 == 0 and s % t == 0:
            return t
    # TODO(synk): pad/mask ragged sequence tiles instead of falling back to
    # the full sequence (VMEM-heavy for very long, prime-length sequences).
    return s


def _vmem_limit(est_bytes: int) -> int:
    """Scoped-VMEM request: 2x estimated footprint, capped at 48 MiB
    (leaves headroom under v7x's 64 MiB physical VMEM)."""
    return int(max(16 << 20, min(48 << 20, 2 * est_bytes)))


def _const_spec(shape):
    """BlockSpec for an operand whose block index never changes (weights /
    biases).  Request single buffering when the JAX version supports it."""
    nd = len(shape)
    idx = lambda *_args, _nd=nd: (0,) * _nd
    try:
        return pl.BlockSpec(shape, idx, pipeline_mode=pl.Buffered(1))
    except Exception:  # older JAX without pipeline_mode / Buffered
        return pl.BlockSpec(shape, idx)


# ----------------------------------------------------------------------------
# Projection kernels (run once per token, not once per query tile)
# ----------------------------------------------------------------------------
def _q_proj_kernel(y_ref, w_ref, b_ref, q_ref, *, scale):
    yv = y_ref[0]                                                  # (TS, D) bf16
    acc = jnp.dot(yv, w_ref[...], preferred_element_type=jnp.float32)
    acc = (acc + b_ref[...]) * scale          # fold 1/sqrt(d_k) into Q
    q_ref[0] = acc.astype(q_ref.dtype)


def _kv_proj_kernel(x_ref, wk_ref, bk_ref, wv_ref, bv_ref, k_ref, v_ref):
    xv = x_ref[0]                                                  # (TS, D) bf16
    k = jnp.dot(xv, wk_ref[...], preferred_element_type=jnp.float32) + bk_ref[...]
    v = jnp.dot(xv, wv_ref[...], preferred_element_type=jnp.float32) + bv_ref[...]
    k_ref[0] = k.astype(k_ref.dtype)
    v_ref[0] = v.astype(v_ref.dtype)


def _project_q(y_bf16, w, b, scale, ts):
    B, S, D = y_bf16.shape
    est = 2 * (ts * D * 2) * 2 + 2 * (D * D * 2 + D * 4) + ts * D * 4
    return pl.pallas_call(
        functools.partial(_q_proj_kernel, scale=scale),
        out_shape=jax.ShapeDtypeStruct((B, S, D), jnp.bfloat16),
        grid=(B, S // ts),
        in_specs=[
            pl.BlockSpec((1, ts, D), lambda bi, si: (bi, si, 0)),
            _const_spec(w.shape),
            _const_spec(b.shape),
        ],
        out_specs=pl.BlockSpec((1, ts, D), lambda bi, si: (bi, si, 0)),
        compiler_params=pltpu.CompilerParams(
            dimension_semantics=("parallel", "parallel"),
            vmem_limit_bytes=_vmem_limit(est),
        ),
    )(y_bf16, w, b)


def _project_kv(x_bf16, wk, bk, wv, bv, ts):
    B, S, D = x_bf16.shape
    est = 2 * (ts * D * 2) * 3 + 2 * 2 * (D * D * 2 + D * 4) + 2 * ts * D * 4
    return pl.pallas_call(
        _kv_proj_kernel,
        out_shape=(jax.ShapeDtypeStruct((B, S, D), jnp.bfloat16),
                   jax.ShapeDtypeStruct((B, S, D), jnp.bfloat16)),
        grid=(B, S // ts),
        in_specs=[
            pl.BlockSpec((1, ts, D), lambda bi, si: (bi, si, 0)),
            _const_spec(wk.shape), _const_spec(bk.shape),
            _const_spec(wv.shape), _const_spec(bv.shape),
        ],
        out_specs=(pl.BlockSpec((1, ts, D), lambda bi, si: (bi, si, 0)),
                   pl.BlockSpec((1, ts, D), lambda bi, si: (bi, si, 0))),
        compiler_params=pltpu.CompilerParams(
            dimension_semantics=("parallel", "parallel"),
            vmem_limit_bytes=_vmem_limit(est),
        ),
    )(x_bf16, wk, bk, wv, bv)


# ----------------------------------------------------------------------------
# Flash-style attention kernel: grid = (batch, query tile, key tile)
# Online softmax carried in VMEM scratch across the key-tile ("arbitrary") axis.
# Heads are handled with an explicit loop over lane-dense slices of D.
# ----------------------------------------------------------------------------
def _flash_attn_kernel(q_ref, k_ref, v_ref, o_ref, m_sc, l_sc, acc_sc,
                       *, n_head, d_k):
    ki = pl.program_id(2)

    @pl.when(ki == 0)
    def _init():
        m_sc[...] = jnp.full(m_sc.shape, -jnp.inf, dtype=m_sc.dtype)
        l_sc[...] = jnp.zeros(l_sc.shape, dtype=l_sc.dtype)
        acc_sc[...] = jnp.zeros(acc_sc.shape, dtype=acc_sc.dtype)

    q = q_ref[0]          # (TQ, D) bf16, 1/sqrt(d_k) already folded in
    k = k_ref[0]          # (TK, D) bf16
    v = v_ref[0]          # (TK, D) bf16

    for h in range(n_head):
        sl = slice(h * d_k, (h + 1) * d_k)
        q_h = q[:, sl]                                    # (TQ, d_k)
        k_h = k[:, sl]                                    # (TK, d_k)
        v_h = v[:, sl]                                    # (TK, d_k)

        # q_h @ k_h^T on the MXU with f32 accumulation -> (TQ, TK)
        s = lax.dot_general(q_h, k_h, (((1,), (1,)), ((), ())),
                            preferred_element_type=jnp.float32)

        m_prev = m_sc[:, h:h + 1]                         # (TQ, 1)
        l_prev = l_sc[:, h:h + 1]                         # (TQ, 1)
        m_new = jnp.maximum(m_prev, jnp.max(s, axis=-1, keepdims=True))
        alpha = jnp.exp(m_prev - m_new)                   # (TQ, 1)
        p = jnp.exp(s - m_new)                            # (TQ, TK)

        m_sc[:, h:h + 1] = m_new
        l_sc[:, h:h + 1] = alpha * l_prev + jnp.sum(p, axis=-1, keepdims=True)
        acc_sc[:, sl] = alpha * acc_sc[:, sl] + jnp.dot(
            p.astype(jnp.bfloat16), v_h, preferred_element_type=jnp.float32)

    @pl.when(ki == pl.num_programs(2) - 1)
    def _finalize():
        outs = []
        for h in range(n_head):
            inv_l = pl.reciprocal(l_sc[:, h:h + 1], approx=True)
            outs.append(acc_sc[:, h * d_k:(h + 1) * d_k] * inv_l)
        o_ref[0] = jnp.concatenate(outs, axis=-1).astype(o_ref.dtype)


# ----------------------------------------------------------------------------
# Wrapper: CrossAttentionLayer.forward(x, y)
#   x: (B, Sk, D) key/value source;  y: (B, Sq, D) query source.
# ----------------------------------------------------------------------------
def cross_attention_layer(x, y, params, *, n_head, out_dtype=None):
    B, Sk, D = x.shape
    By, Sq, Dy = y.shape
    assert B == By and D == Dy and D % n_head == 0
    d_k = D // n_head
    scale = 1.0 / math.sqrt(d_k)
    out_dtype = x.dtype if out_dtype is None else out_dtype

    # bf16 at the DMA boundary: halves HBM->VMEM bytes; matmuls already run
    # with bf16 operands / f32 accumulation.
    xb = x.astype(jnp.bfloat16)
    yb = y.astype(jnp.bfloat16)

    TQ = _choose_seq_tile(Sq)
    TK = _choose_seq_tile(Sk)
    nq, nk = Sq // TQ, Sk // TK

    # Stage 1: projections (Q scaled), computed once per token.
    q = _project_q(yb, params["w_q"], params["b_q"], scale, TQ)
    k, v = _project_kv(xb, params["w_k"], params["b_k"],
                       params["w_v"], params["b_v"], TK)

    # Stage 2: flash-style attention with online softmax over key tiles.
    out_itemsize = jnp.dtype(out_dtype).itemsize
    est = (2 * (TQ * D * 2)                    # q blocks (double-buffered)
           + 2 * 2 * (TK * D * 2)              # k, v blocks
           + 2 * (TQ * D * out_itemsize)       # output blocks
           + TQ * D * 4 + 2 * TQ * 128 * 4     # acc / m / l scratch (padded)
           + 4 * TQ * TK * 4)                  # per-head score temporaries
    q_spec = pl.BlockSpec((1, TQ, D), lambda b, qi, ki: (b, qi, 0))
    kv_spec = pl.BlockSpec((1, TK, D), lambda b, qi, ki: (b, ki, 0))

    return pl.pallas_call(
        functools.partial(_flash_attn_kernel, n_head=n_head, d_k=d_k),
        out_shape=jax.ShapeDtypeStruct((B, Sq, D), out_dtype),
        grid=(B, nq, nk),
        in_specs=[q_spec, kv_spec, kv_spec],
        out_specs=pl.BlockSpec((1, TQ, D), lambda b, qi, ki: (b, qi, 0)),
        scratch_shapes=[
            pltpu.VMEM((TQ, n_head), jnp.float32),   # running max  (per head)
            pltpu.VMEM((TQ, n_head), jnp.float32),   # running sum  (per head)
            pltpu.VMEM((TQ, D), jnp.float32),        # output accumulator
        ],
        compiler_params=pltpu.CompilerParams(
            dimension_semantics=("parallel", "parallel", "arbitrary"),
            vmem_limit_bytes=_vmem_limit(est),
        ),
    )(q, k, v)


# ----------------------------------------------------------------------------
# Deterministic parameter construction (weights bf16, biases f32).
# ----------------------------------------------------------------------------
def make_params(key, d_model):
    ks = jax.random.split(key, 6)
    std = 1.0 / math.sqrt(d_model)

    def w(k):
        return (std * jax.random.normal(k, (d_model, d_model), jnp.float32)
                ).astype(jnp.bfloat16)

    def b(k):
        return 0.1 * jax.random.normal(k, (1, d_model), jnp.float32)

    return {
        "w_q": w(ks[0]), "b_q": b(ks[1]),
        "w_k": w(ks[2]), "b_k": b(ks[3]),
        "w_v": w(ks[4]), "b_v": b(ks[5]),
    }


# ----------------------------------------------------------------------------
# Pure-JAX reference (mirrors the PyTorch forward) for a correctness check.
# ----------------------------------------------------------------------------
def _ref_forward(x, y, params, *, n_head):
    B, Sk, D = x.shape
    _, Sq, _ = y.shape
    d_k = D // n_head

    wq = params["w_q"].astype(jnp.float32)
    wk = params["w_k"].astype(jnp.float32)
    wv = params["w_v"].astype(jnp.float32)

    q = (y @ wq + params["b_q"][0]).reshape(B, Sq, n_head, d_k).transpose(0, 2, 1, 3)
    k = (x @ wk + params["b_k"][0]).reshape(B, Sk, n_head, d_k).transpose(0, 2, 1, 3)
    v = (x @ wv + params["b_v"][0]).reshape(B, Sk, n_head, d_k).transpose(0, 2, 1, 3)

    s = jnp.einsum("bhqd,bhkd->bhqk", q, k) / math.sqrt(d_k)
    p = jax.nn.softmax(s, axis=-1)
    o = jnp.einsum("bhqk,bhkd->bhqd", p, v).transpose(0, 2, 1, 3).reshape(B, Sq, D)
    return o


if __name__ == "__main__":
    # Small shapes consistent with the module: batch=2, seq=8, d_model=32, 4 heads.
    B, S, D = 2, 8, 32
    n_heads = 4

    key = jax.random.PRNGKey(0)
    kx, ky, kp = jax.random.split(key, 3)
    x = jax.random.normal(kx, (B, S, D), jnp.float32)   # key/value source
    y = jax.random.normal(ky, (B, S, D), jnp.float32)   # query source
    params = make_params(kp, D)

    out = cross_attention_layer(x, y, params, n_head=n_heads)
    out = jax.block_until_ready(out)

    ref = _ref_forward(x, y, params, n_head=n_heads)
    np.testing.assert_allclose(np.asarray(out), np.asarray(ref), rtol=2e-2, atol=2e-2)

    print("KERNEL_OK")
</pallas_src>

<mosaic_0001>
module attributes {stable_mosaic.version = 11 : i64} {
  func.func @_q_proj_kernel(%arg0: i32, %arg1: i32, %arg2: memref<1x8x32xbf16, #tpu.memory_space<vmem>>, %arg3: memref<32x32xbf16, #tpu.memory_space<vmem>>, %arg4: memref<1x32xf32, #tpu.memory_space<vmem>>, %arg5: memref<1x8x32xbf16, #tpu.memory_space<vmem>>) attributes {dimension_semantics = [#tpu.dimension_semantics<parallel>, #tpu.dimension_semantics<parallel>], iteration_bounds = array<i64: 2, 1>, scalar_prefetch = 0 : i64, scratch_operands = 0 : i64, tpu.core_type = #tpu.core_type<tc>, window_params = [{transform_indices = @transform_0, window_bounds = array<i64: 1, 8, 32>}, {pipeline_mode = #tpu.pipeline_mode<synchronous>, transform_indices = @transform_1, window_bounds = array<i64: 32, 32>}, {pipeline_mode = #tpu.pipeline_mode<synchronous>, transform_indices = @transform_2, window_bounds = array<i64: 1, 32>}, {transform_indices = @transform_3, window_bounds = array<i64: 1, 8, 32>}]} {
    %c0 = arith.constant 0 : index
    %c0_0 = arith.constant 0 : index
    %c0_1 = arith.constant 0 : index
    %0 = vector.load %arg2[%c0, %c0_0, %c0_1] : memref<1x8x32xbf16, #tpu.memory_space<vmem>>, vector<1x8x32xbf16>
    %1 = vector.shape_cast %0 : vector<1x8x32xbf16> to vector<8x32xbf16>
    %c0_2 = arith.constant 0 : index
    %c0_3 = arith.constant 0 : index
    %2 = vector.load %arg3[%c0_2, %c0_3] : memref<32x32xbf16, #tpu.memory_space<vmem>>, vector<32x32xbf16>
    %cst = arith.constant dense<0.000000e+00> : vector<8x32xf32>
    %3 = tpu.matmul %1, %2, %cst {dimension_numbers = #tpu.dot_dimension_numbers<[1], [0], [0], [1], [0, 0, 1, 1], [], []>} : vector<8x32xbf16>, vector<32x32xbf16>, vector<8x32xf32> -> vector<8x32xf32>
    %c0_4 = arith.constant 0 : index
    %c0_5 = arith.constant 0 : index
    %4 = vector.load %arg4[%c0_4, %c0_5] : memref<1x32xf32, #tpu.memory_space<vmem>>, vector<1x32xf32>
    %5 = vector.broadcast %4 : vector<1x32xf32> to vector<8x32xf32>
    %6 = arith.addf %3, %5 : vector<8x32xf32>
    %cst_6 = arith.constant 0.353553385 : f32
    %7 = vector.broadcast %cst_6 : f32 to vector<8x32xf32>
    %8 = arith.mulf %6, %7 : vector<8x32xf32>
    %9 = arith.truncf %8 : vector<8x32xf32> to vector<8x32xbf16>
    %c0_7 = arith.constant 0 : index
    %c0_8 = arith.constant 0 : index
    %c0_9 = arith.constant 0 : index
    %10 = vector.load %arg5[%c0_7, %c0_8, %c0_9] : memref<1x8x32xbf16, #tpu.memory_space<vmem>>, vector<1x8x32xbf16>
    %11 = vector.shape_cast %10 : vector<1x8x32xbf16> to vector<8x32xbf16>
    %12 = vector.shape_cast %9 : vector<8x32xbf16> to vector<1x8x32xbf16>
    tpu.vector_store %arg5[%c0_7, %c0_8, %c0_9], %12 {strides = array<i32>} : memref<1x8x32xbf16, #tpu.memory_space<vmem>>, vector<1x8x32xbf16>,
    return
  }
  func.func @transform_0(%arg0: i32, %arg1: i32) -> (i32, i32, i32) {
    %c0_i32 = arith.constant 0 : i32
    %c0_i32_0 = arith.constant 0 : i32
    return %arg0, %arg1, %c0_i32 : i32, i32, i32
  }
  func.func @transform_1(%arg0: i32, %arg1: i32) -> (i32, i32) {
    %c0_i32 = arith.constant 0 : i32
    %c0_i32_0 = arith.constant 0 : i32
    %c0_i32_1 = arith.constant 0 : i32
    return %c0_i32, %c0_i32_0 : i32, i32
  }
  func.func @transform_2(%arg0: i32, %arg1: i32) -> (i32, i32) {
    %c0_i32 = arith.constant 0 : i32
    %c0_i32_0 = arith.constant 0 : i32
    %c0_i32_1 = arith.constant 0 : i32
    return %c0_i32, %c0_i32_0 : i32, i32
  }
  func.func @transform_3(%arg0: i32, %arg1: i32) -> (i32, i32, i32) {
    %c0_i32 = arith.constant 0 : i32
    %c0_i32_0 = arith.constant 0 : i32
    return %arg0, %arg1, %c0_i32 : i32, i32, i32
  }
}

</mosaic_0001>

<llo_original>
// kernel: tpu_custom_call.1
$region0: #{tpu_custom_call.1}
  #allocation0 [shape = 'u32[]', space=smem, size = 0x4, offset = 0x4, fixed_abs, tag = 'smem constant byte address 0x4 - core index']
  #allocation1 [shape = 'u32[144,128]{1,0:T(1,128)}', space=vmem, size = 0x12000, scoped, tag = 'internal scratch']
  %s0 = inlined_call_operand.hbm [shape: bf16[2,8,32], index: 0, kind: input, shape index: {}]
  %s1 = inlined_call_operand.hbm [shape: bf16[32,32], index: 1, kind: input, shape index: {}]
  %s2 = inlined_call_operand.vmem [shape: f32[1,32], index: 2, kind: input, shape index: {}]
  %s3 = inlined_call_operand.hbm [shape: bf16[2,8,32], index: 3, kind: output, shape index: {}]
  %s4 = sld [smem:[#allocation0]]
  $region53: #{tpu_custom_call.1} parent=0
    _
  %s6 = ssub.s32 1, %s4
  %s7 = scalar_select 0, %s6, %s4
  $region1: #{tpu_custom_call.1} parent=0
    #allocation2 [shape = 'u8[4096]{0}', space=vmem, size = 0x1000, scoped, tag = 'input window, operand 0']
    #allocation3 [shape = 's32[2]{0}', space=sflag, size = 0x8, scoped, tag = 'scoped memory for tpu_custom_call.1']
    #allocation4 [shape = 's32[2]{0}', space=sflag, size = 0x8, scoped, tag = 'scoped memory for tpu_custom_call.1']
    #allocation5 [shape = 'u8[8192]{0}', space=vmem, size = 0x2000, scoped, tag = 'input window, operand 1, single buffered']
    #allocation6 [shape = 's32[1]{0}', space=sflag, size = 0x4, scoped, tag = 'scoped memory for tpu_custom_call.1']
    #allocation7 [shape = 'u8[4096]{0}', space=vmem, size = 0x1000, scoped, tag = 'output window, operand 0']
    %8 = vsyncpa [#allocation3], 0
    %s9 = scalar_lea.sflag [#allocation3], 1
    %10 = vsyncpa %s9, 0
    %11 = vsyncpa [#allocation6], 0
    %12 = vsyncpa [#allocation4], 0
    %s13 = scalar_lea.sflag [#allocation4], 1
    %14 = vsyncpa %s13, 0
    loop: start=0, step=1, limit=4
    $region2: #{tpu_custom_call.1} parent=1 // loop_pre_header
      _
    $region3: #{tpu_custom_call.1} parent=1 // loop_header
      %s16 = sphi 0, %s20
      %p17 = scmp.ge.s32.totalorder %s16, 4
      %s23 = sphi 0, %s35
      %s24 = sphi 0, %s31
      %s25 = sphi 0, %s23
      %s26 = sphi 0, %s24
      %s27 = sphi 0, %s25
      %s28 = sphi 0, %s26
      %s40 = sphi 0, %s42
      %s43 = sphi 0, %s40
      %s44 = sphi 0, %s43
      %s60 = sphi 0, %s44
      %s64 = sphi 0, %s64
      %s66 = sphi 0, %s64
      %s67 = sphi 0, %s66
      %s81 = sphi 0, %s67
      %s85 = sphi 0, %s85
      %s87 = sphi 0, %s85
      %s88 = sphi 0, %s87
      %s102 = sphi 0, %s88
      %s110 = sphi 0, %s112
      %s113 = sphi 0, %s110
      %s114 = sphi 0, %s113
      %s130 = sphi 0, %s114
    $region4: #{tpu_custom_call.1} parent=1 // loop_header_branch
      %19 = sbr.rel (%p17) target = $region8
    $region5: #{tpu_custom_call.1} parent=1 // loop_body
      %s21 = ssub.s32 %s16, 1
      %s22 = ssub.s32 %s16, 2
      %s29 = sadd.s32 1, %s24
      %p30 = scmp.ge.s32.totalorder %s29, 1
      %s31 = scalar_select %p30, 0, %s29
      %s32 = sadd.s32 1, %s23
      %s33 = scalar_select %p30, %s32, %s23
      %p34 = scmp.ge.s32.totalorder %s33, 2
      %s35 = scalar_select %p34, 0, %s33
      %s36 = ssub.s32 %s23, %s35
      %s37 = ssub.s32 %s24, %s31
      %s38 = sor.u32 %s36, %s37
      %p39 = scmp.eq.s32.totalorder %s38, 0
      %s41 = sadd.s32 %s40, 1
      %s42 = scalar_select %p39, %s40, %s41
      %p45 = pneg %p39
      %p46 = scmp.eq.s32.totalorder %s16, 1
      %p47 = por %p45, %p46
      %p48 = scmp.ne.s32.totalorder %s40, %s43
      %p49 = scmp.eq.s32.totalorder %s16, 0
      %p50 = por %p48, %p49
      %p51 = scmp.ne.s32.totalorder %s40, %s43
      %p52 = scmp.eq.s32.totalorder %s21, 1
      %p53 = por %p51, %p52
      %p54 = scmp.ne.s32.totalorder %s43, %s44
      %p55 = scmp.eq.s32.totalorder %s21, 0
      %p56 = por %p54, %p55
      %p57 = scmp.ne.s32.totalorder %s43, %s44
      %p58 = scmp.eq.s32.totalorder %s22, 1
      %p59 = por %p57, %p58
      %p61 = scmp.ne.s32.totalorder %s44, %s60
      %p62 = scmp.eq.s32.totalorder %s22, 0
      %p63 = por %p61, %p62
      %s65 = sadd.s32 %s64, 1
      %p68 = scmp.eq.s32.totalorder %s16, 1
      %p69 = scmp.ne.s32.totalorder %s64, %s66
      %p70 = scmp.eq.s32.totalorder %s16, 0
      %p71 = por %p69, %p70
      %p72 = scmp.ne.s32.totalorder %s64, %s66
      %p73 = scmp.eq.s32.totalorder %s21, 1
      %p74 = por %p72, %p73
      %p75 = scmp.ne.s32.totalorder %s66, %s67
      %p76 = scmp.eq.s32.totalorder %s21, 0
      %p77 = por %p75, %p76
      %p78 = scmp.ne.s32.totalorder %s66, %s67
      %p79 = scmp.eq.s32.totalorder %s22, 1
      %p80 = por %p78, %p79
      %p82 = scmp.ne.s32.totalorder %s67, %s81
      %p83 = scmp.eq.s32.totalorder %s22, 0
      %p84 = por %p82, %p83
      %s86 = sadd.s32 %s85, 1
      %p89 = scmp.eq.s32.totalorder %s16, 1
      %p90 = scmp.ne.s32.totalorder %s85, %s87
      %p91 = scmp.eq.s32.totalorder %s16, 0
      %p92 = por %p90, %p91
      %p93 = scmp.ne.s32.totalorder %s85, %s87
      %p94 = scmp.eq.s32.totalorder %s21, 1
      %p95 = por %p93, %p94
      %p96 = scmp.ne.s32.totalorder %s87, %s88
      %p97 = scmp.eq.s32.totalorder %s21, 0
      %p98 = por %p96, %p97
      %p99 = scmp.ne.s32.totalorder %s87, %s88
      %p100 = scmp.eq.s32.totalorder %s22, 1
      %p101 = por %p99, %p100
      %p103 = scmp.ne.s32.totalorder %s88, %s102
      %p104 = scmp.eq.s32.totalorder %s22, 0
      %p105 = por %p103, %p104
      %s106 = ssub.s32 %s23, %s35
      %s107 = ssub.s32 %s24, %s31
      %s108 = sor.u32 %s106, %s107
      %p109 = scmp.eq.s32.totalorder %s108, 0
      %s111 = sadd.s32 %s110, 1
      %s112 = scalar_select %p109, %s110, %s111
      %p115 = pneg %p109
      %p116 = scmp.eq.s32.totalorder %s16, 1
      %p117 = por %p115, %p116
      %p118 = scmp.ne.s32.totalorder %s110, %s113
      %p119 = scmp.eq.s32.totalorder %s16, 0
      %p120 = por %p118, %p119
      %p121 = scmp.ne.s32.totalorder %s110, %s113
      %p122 = scmp.eq.s32.totalorder %s21, 1
      %p123 = por %p121, %p122
      %p124 = scmp.ne.s32.totalorder %s113, %s114
      %p125 = scmp.eq.s32.totalorder %s21, 0
      %p126 = por %p124, %p125
      %p127 = scmp.ne.s32.totalorder %s113, %s114
      %p128 = scmp.eq.s32.totalorder %s22, 1
      %p129 = por %p127, %p128
      %p131 = scmp.ne.s32.totalorder %s114, %s130
      %p132 = scmp.eq.s32.totalorder %s22, 0
      %p133 = por %p131, %p132
      %p134 = scmp.le.s32.totalorder 1, %s16
      %p135 = scmp.lt.s32.totalorder %s16, 3
      %p136 = pnand %p134, %p135
      %p137 = pneg %p136
      // Predicated region
      $region9: #{tpu_custom_call.1} parent=5 // pred_check
        _
      $region10: #{tpu_custom_call.1} parent=5 // pred_check_branch
        %139 = sbr.rel (%p136) target = $region12
      $region11: #{tpu_custom_call.1} parent=5 // pred_region
        %s140 = ssub.s32 %s16, 1
        // Predicated region
        $region13: #{tpu_custom_call.1} parent=11 // pred_check
          %p141 = pneg %p77
        $region14: #{tpu_custom_call.1} parent=11 // pred_check_branch
          %143 = sbr.rel (%p141) target = $region16
        $region15: #{tpu_custom_call.1} parent=11 // pred_region
          %s145 = ssub.s32 256, 256
          %146 = vsyncadd [#allocation6], %s145
          %s147 = sshll.u32 [#allocation5], 4
          %s148 = int_to_ptr.vmem [resolvable:$true] %s147
          %153 = dma.hbm_to_vmem [thread:$0]  %s1, 256, %s148, [#allocation6], 64, 64, 4
        $region16: #{tpu_custom_call.1} parent=11 // pred_fallthru
          _
        // Predicated region
        $region17: #{tpu_custom_call.1} parent=11 // pred_check
          %p154 = pneg %p98
        $region18: #{tpu_custom_call.1} parent=11 // pred_check_branch
          %156 = sbr.rel (%p154) target = $region20
        $region19: #{tpu_custom_call.1} parent=11 // pred_region
          _
        $region20: #{tpu_custom_call.1} parent=11 // pred_fallthru
          _
      $region12: #{tpu_custom_call.1} parent=5 // pred_fallthru
        _
      %p157 = scmp.lt.s32.totalorder %s16, 2
      // Predicated region
      $region21: #{tpu_custom_call.1} parent=5 // pred_check
        %p158 = pneg %p157
      $region22: #{tpu_custom_call.1} parent=5 // pred_check_branch
        %160 = sbr.rel (%p158) target = $region24
      $region23: #{tpu_custom_call.1} parent=5 // pred_region
        // Predicated region
        $region25: #{tpu_custom_call.1} parent=23 // pred_check
          %p161 = pneg %p50
        $region26: #{tpu_custom_call.1} parent=23 // pred_check_branch
          %163 = sbr.rel (%p161) target = $region28
        $region27: #{tpu_custom_call.1} parent=23 // pred_region
          %s164 = sand.u32 %s40, 1
          %s165 = scalar_lea.sflag [#allocation3], %s164
          %s166 = sand.u32 %s40, 1
          %s167 = smul.addr %s166, 4
          %s168 = scalar_lea.vmem [#allocation2], %s167
          %s170 = ssub.s32 64, 64
          %171 = vsyncadd %s165, %s170
          %s172 = sadd.s32 %s24, %s23
          %s173 = smul.addr %s172, 64
          %s174 = scalar_lea.hbm %s0, %s173
          %s176 = sshll.u32 %s168, 4
          %s177 = int_to_ptr.vmem [resolvable:$true] %s176
          %179 = dma.hbm_to_vmem [thread:$0]  %s174, 64, %s177, %s165
        $region28: #{tpu_custom_call.1} parent=23 // pred_fallthru
          _
      $region24: #{tpu_custom_call.1} parent=5 // pred_fallthru
        _
      %p180 = scmp.le.s32.totalorder 1, %s16
      %p181 = scmp.lt.s32.totalorder %s16, 3
      %p182 = pnand %p180, %p181
      %p183 = pneg %p182
      // Predicated region
      $region29: #{tpu_custom_call.1} parent=5 // pred_check
        _
      $region30: #{tpu_custom_call.1} parent=5 // pred_check_branch
        %185 = sbr.rel (%p182) target = $region32
      $region31: #{tpu_custom_call.1} parent=5 // pred_region
        %s186 = ssub.s32 %s16, 1
        %s187 = sand.u32 %s43, 1
        %s188 = scalar_lea.sflag [#allocation3], %s187
        %s189 = sand.u32 %s43, 1
        %s190 = smul.addr %s189, 4
        %s191 = scalar_lea.vmem [#allocation2], %s190
        // Predicated region
        $region33: #{tpu_custom_call.1} parent=31 // pred_check
          %p192 = pneg %p56
        $region34: #{tpu_custom_call.1} parent=31 // pred_check_branch
          %194 = sbr.rel (%p192) target = $region36
        $region35: #{tpu_custom_call.1} parent=31 // pred_region
          %195 = dma.done %s188, 64
        $region36: #{tpu_custom_call.1} parent=31 // pred_fallthru
          _
        // Predicated region
        $region37: #{tpu_custom_call.1} parent=31 // pred_check
          %p196 = pneg %p77
        $region38: #{tpu_custom_call.1} parent=31 // pred_check_branch
          %198 = sbr.rel (%p196) target = $region40
        $region39: #{tpu_custom_call.1} parent=31 // pred_region
          %199 = dma.done [#allocation6], 256
        $region40: #{tpu_custom_call.1} parent=31 // pred_fallthru
          _
        %s200 = sand.u32 %s43, 1
        %s201 = scalar_lea.sflag [#allocation3], %s200
        %s202 = sand.u32 %s43, 1
        %s203 = smul.addr %s202, 4
        %s204 = scalar_lea.vmem [#allocation2], %s203
        %p205 = pneg %p56
        %p206 = pneg %p53
        %p207 = pneg %p77
        %p208 = pneg %p74
        %p209 = pneg %p98
        %p210 = pneg %p95
        %p211 = pneg %p126
        %p212 = pneg %p123
        %s213 = sand.u32 %s113, 1
        %s214 = scalar_lea.sflag [#allocation4], %s213
        %s215 = sand.u32 %s113, 1
        %s216 = smul.addr %s215, 4
        %s217 = scalar_lea.vmem [#allocation7], %s216
        %v219 = vld [vmem:[%s191] sm:$0xf]
        %v220 = vld [vmem:[#allocation5] sm:$0xf]
        %v221 = vld [vmem:[#allocation5 + $0x4] sm:$0xf]
        %v222 = vld [vmem:[#allocation5 + $0x8] sm:$0xf]
        %v223 = vld [vmem:[#allocation5 + $0xc] sm:$0xf]
        %v224 = vld [vmem:[%s2] sm:$0x1]
        %v226 = vlaneseq
        %v227 = vshrl.u32 %v226, 7
        %v228 = vsub.s32 0, %v227
        %v229 = vrot.slane %v224, %v228
        %v235 = vunpack.c.l.b16 %v220
        %v236 = vunpack.c.l.b16 %v221
        %v237 = vunpack.c.l.b16 %v222
        %v238 = vunpack.c.l.b16 %v223
        %v239 = vpack.c.b16 %v236, %v235
        %v240 = vpack.c.b16 %v238, %v237
        %vm243 = vcmask 261120
        %v245 = vsel %vm243, %v219, 0
        %247 = vmatprep.subr.bf16.mxu0 0
        %248 = vmatpush1.bf16.msra.mxu0 0
        %249 = vmatprep.subr.bf16.mxu0 0
        %250 = vmatpush1.bf16.msra.mxu0 0
        %251 = vmatprep.subr.bf16.mxu0 0
        %252 = vmatpush1.bf16.msra.mxu0 0
        %253 = vmatprep.subr.bf16.mxu0 0
        %254 = vmatpush1.bf16.msra.mxu0 0
        %255 = vmatprep.subr.bf16.mxu0 0
        %256 = vmatpush1.bf16.msra.mxu0 0
        %257 = vmatprep.subr.bf16.mxu0 0
        %258 = vmatpush1.bf16.msra.mxu0 0
        %259 = vmatprep.subr.bf16.mxu0 0
        %260 = vmatpush1.bf16.msra.mxu0 %v240
        %261 = vmatprep.subr.bf16.mxu0 0
        %262 = vmatpush1.bf16.msra.mxu0 %v239
        %263 = vmatprep.subr.bf16.mxu0 0
        %264 = vmatpush2.bf16.msra.mxu0 0
        %265 = vmatprep.subr.bf16.mxu0 0
        %266 = vmatpush2.bf16.msra.mxu0 0
        %267 = vmatprep.subr.bf16.mxu0 0
        %268 = vmatpush2.bf16.msra.mxu0 0
        %269 = vmatprep.subr.bf16.mxu0 0
        %270 = vmatpush2.bf16.msra.mxu0 0
        %271 = vmatprep.subr.bf16.mxu0 0
        %272 = vmatpush2.bf16.msra.mxu0 0
        %273 = vmatprep.subr.bf16.mxu0 0
        %274 = vmatpush2.bf16.msra.mxu0 0
        %275 = vmatprep.subr.bf16.mxu0 0
        %276 = vmatpush2.bf16.msra.mxu0 0
        %277 = vmatprep.subr.bf16.mxu0 0
        %278 = vmatpush2.bf16.msra.mxu0 0
        %279 = vmatprep.mubr.bf16.mxu0 0
        %280 = vmatmul.mubr.bf16.gmra.mxu0 %v245
        %v281 = vpop.f32.mrf.mxu0
        %v282 = vadd.f32 %v229, %v281
        %v283 = vpop.f32.mrf.mxu0
        %v284 = vpop.f32.mrf.mxu0
        %v285 = vpop.f32.mrf.mxu0
        %286 = vdwg.mxu0
        %v287 = vmul.f32 %v282, 0.35355338
        %v288 = vpack.c.bf16 %v287, %v287
        %vm289 = vcmask 257024
        %290 = vst.msk [vmem:[%s217] sm:$0xf] %vm289, %v288
        %s291 = sand.u32 %s113, 1
        %s292 = scalar_lea.sflag [#allocation4], %s291
        %s293 = sand.u32 %s113, 1
        %s294 = smul.addr %s293, 4
        %s295 = scalar_lea.vmem [#allocation7], %s294
        // Predicated region
        $region41: #{tpu_custom_call.1} parent=31 // pred_check
          %p296 = pneg %p123
        $region42: #{tpu_custom_call.1} parent=31 // pred_check_branch
          %298 = sbr.rel (%p296) target = $region44
        $region43: #{tpu_custom_call.1} parent=31 // pred_region
          %s300 = ssub.s32 64, 64
          %301 = vsyncadd %s292, %s300
          %s302 = sadd.s32 %s26, %s25
          %s303 = smul.addr %s302, 64
          %s304 = scalar_lea.hbm %s3, %s303
          %s306 = sshll.u32 %s295, 4
          %s307 = int_to_ptr.vmem [resolvable:$true] %s306
          %309 = dma.vmem_to_hbm [thread:$0]  %s307, 64, %s304, %s292
        $region44: #{tpu_custom_call.1} parent=31 // pred_fallthru
          _
      $region32: #{tpu_custom_call.1} parent=5 // pred_fallthru
        _
      %p310 = scmp.le.s32.totalorder 2, %s16
      // Predicated region
      $region45: #{tpu_custom_call.1} parent=5 // pred_check
        %p311 = pneg %p310
      $region46: #{tpu_custom_call.1} parent=5 // pred_check_branch
        %313 = sbr.rel (%p311) target = $region48
      $region47: #{tpu_custom_call.1} parent=5 // pred_region
        %s314 = ssub.s32 %s16, 2
        // Predicated region
        $region49: #{tpu_custom_call.1} parent=47 // pred_check
          %p315 = pneg %p129
        $region50: #{tpu_custom_call.1} parent=47 // pred_check_branch
          %317 = sbr.rel (%p315) target = $region52
        $region51: #{tpu_custom_call.1} parent=47 // pred_region
          %s318 = sand.u32 %s114, 1
          %s319 = scalar_lea.sflag [#allocation4], %s318
          %s320 = sand.u32 %s114, 1
          %s321 = smul.addr %s320, 4
          %s322 = scalar_lea.vmem [#allocation7], %s321
          %323 = dma.done %s319, 64
        $region52: #{tpu_custom_call.1} parent=47 // pred_fallthru
          _
      $region48: #{tpu_custom_call.1} parent=5 // pred_fallthru
        _
    $region6: #{tpu_custom_call.1} parent=1 // loop_footer
      %s20 = sadd.s32 1, %s16
    $region7: #{tpu_custom_call.1} parent=1 // loop_footer_branch
      %15 = sbr.rel target = $region3
    $region8: #{tpu_custom_call.1} parent=1 // loop_exit
      _
    %324 = vsyncpa [#allocation3], 1
    %s325 = scalar_lea.sflag [#allocation3], 1
    %326 = vsyncpa %s325, 1
    %327 = vsyncpa [#allocation6], 1
    %328 = vsyncpa [#allocation4], 1
    %s329 = scalar_lea.sflag [#allocation4], 1
    %330 = vsyncpa %s329, 1

</llo_original>
